<compile_context>
chip_gen: v7x
topology: tpu7x:2x2x1
jax: 0.10.0
libtpu: 0.0.40
codegen_flags: <defaults>
</compile_context>

<pallas_src>
import jax
import jax.numpy as jnp
from jax import lax
from jax.experimental import pallas as pl
from jax.experimental.pallas import tpu as pltpu

_LANES = 128
_SUBLANES = 8  # f32 sublane tile


def _msle_jax(pred, target):
    """Pure-JAX path (also the reference): mirrors the PyTorch forward exactly."""
    loss = (jnp.log1p(pred[:, :3]) - jnp.log1p(target[:, :3])) ** 2
    return loss[:, 1].mean()


def _make_kernel(*, col, num_cols, total, tile_rows, tiles_per_chunk):
    """Build the kernel. Preconditions: num_cols | 128 (power of two), total < 2**31."""

    def kernel(p_ref, t_ref, out_ref):
        c = pl.program_id(0)   # chunk axis ("parallel")
        k = pl.program_id(1)   # tile-within-chunk ("arbitrary", reduction)

        # Output block index is constant along k -> block stays VMEM-resident;
        # accumulate straight into out_ref (no scratch, no final copy).
        @pl.when(k == 0)
        def _():
            out_ref[...] = jnp.zeros_like(out_ref)

        # Inputs arrive in their storage dtype; cast to f32 only here.
        p = p_ref[...].astype(jnp.float32)
        t = t_ref[...].astype(jnp.float32)
        d = jnp.log1p(p) - jnp.log1p(t)
        sq = d * d

        rows_here = sq.shape[0]                         # static (trace time)
        b = c * tiles_per_chunk + k                     # UNclamped block index
        row = lax.broadcasted_iota(jnp.int32, (rows_here, _LANES), 0)
        lane = lax.broadcasted_iota(jnp.int32, (rows_here, _LANES), 1)
        flat = (b * tile_rows + row) * _LANES + lane    # row-major index into (N, C)

        # Column select: since num_cols | 128, flat % num_cols == lane % num_cols,
        # and num_cols is a power of two -> bitwise AND (free VPU filler).
        col_ok = jnp.bitwise_and(lane, num_cols - 1) == col
        # Mask padded / ragged-tail / OOB-garbage elements. log1p of garbage may
        # be NaN/Inf; jnp.where *selects*, so it never leaks into the sum.
        in_bounds = flat < total
        sq = jnp.where(col_ok & in_bounds, sq, 0.0)

        # Partial-reduce the (rows_here, 128) tile to one (8, 128) vreg with pure
        # VPU adds (no per-tile cross-lane XLU work in the hot loop).
        if rows_here % _SUBLANES == 0:
            part = jnp.sum(sq.reshape(-1, _SUBLANES, _LANES), axis=0)
        else:
            # Tiny-input fallback (rows_here < 8 or ragged full-extent block).
            srow = lax.broadcasted_iota(jnp.int32, (_SUBLANES, _LANES), 0)
            part = jnp.where(srow == 0, jnp.sum(sq, axis=0, keepdims=True), 0.0)

        out_ref[...] += part

    return kernel


def _device_defaults():
    """(tile_rows, num_chunks) heuristics per TPU generation."""
    kind, cores = "", 1
    try:
        dev = jax.devices()[0]
        kind = (getattr(dev, "device_kind", "") or "").lower()
        cores = int(getattr(dev, "num_cores", 1) or 1)
    except Exception:
        pass
    is_v7 = "v7" in kind
    # v7x (3.2 TB/s): 2048-row tiles (1 MiB/buffer) so the pipeline isn't
    # step-overhead bound; v5e/v6e are already near roofline at 1024 rows.
    tile_rows = 2048 if is_v7 else 1024
    # The "parallel" chunk axis only pays off with >1 TensorCore per chip (v7x).
    # TODO(synk): verify on v7x xprof that "parallel" lands on both TCs; if it
    # serializes, switch to pltpu.CORE_PARALLEL / pl.core_map.
    num_chunks = 2 if (is_v7 or cores > 1) else 1
    return tile_rows, num_chunks


def _sublane_req(dtype):
    # second-minor tiling requirement per element width (f32:8, bf16:16, int8/fp8:32)
    return {4: 8, 2: 16, 1: 32}.get(jnp.dtype(dtype).itemsize, 8)


def _msle_pallas(pred, target, *, tile_rows=None, num_chunks=None, col=1):
    n, num_cols = pred.shape
    total = n * num_cols

    dflt_rows, dflt_chunks = _device_defaults()
    tile_rows = dflt_rows if tile_rows is None else tile_rows
    num_chunks = dflt_chunks if num_chunks is None else num_chunks

    # Lane-dense view of the RAW buffers (no slice / cast / mask pre-pass).
    # A contiguous (N, C) -> (N*C/128, 128) reshape is a free bitcast.
    if total % _LANES == 0:
        p2 = pred.reshape(-1, _LANES)
        t2 = target.reshape(-1, _LANES)
    else:
        # Uncommon ragged case: one pad pass (pad values irrelevant: the kernel
        # masks on flat-index < total before summing).
        pad = (-total) % _LANES
        p2 = jnp.pad(pred.reshape(-1), (0, pad)).reshape(-1, _LANES)
        t2 = jnp.pad(target.reshape(-1), (0, pad)).reshape(-1, _LANES)
    rows = p2.shape[0]

    # Tile sizing: a multiple of the dtype sublane tile when tiling, or the full
    # row extent for tiny inputs (exempt from the divisibility rule).
    req = max(_sublane_req(pred.dtype), _sublane_req(target.dtype))
    tile_rows = max(req, (tile_rows + req - 1) // req * req)
    tile_rows = min(tile_rows, rows)

    num_tiles = pl.cdiv(rows, tile_rows)
    n_chunks = num_chunks if num_tiles >= num_chunks else 1
    tiles_per_chunk = pl.cdiv(num_tiles, n_chunks)

    # Clamp phantom blocks (grid padding past the last real tile) into bounds;
    # the kernel's flat-index mask (from the UNclamped id) zeroes their sum.
    def in_map(c, k):
        return (jnp.minimum(c * tiles_per_chunk + k, num_tiles - 1), 0)

    kernel = _make_kernel(col=col, num_cols=num_cols, total=total,
                          tile_rows=tile_rows, tiles_per_chunk=tiles_per_chunk)

    partials = pl.pallas_call(
        kernel,
        out_shape=jax.ShapeDtypeStruct((_SUBLANES, _LANES * n_chunks), jnp.float32),
        grid_spec=pltpu.PrefetchScalarGridSpec(
            num_scalar_prefetch=0,
            grid=(n_chunks, tiles_per_chunk),
            in_specs=[pl.BlockSpec((tile_rows, _LANES), in_map),
                      pl.BlockSpec((tile_rows, _LANES), in_map)],
            out_specs=pl.BlockSpec((_SUBLANES, _LANES), lambda c, k: (0, c)),
        ),
        compiler_params=pltpu.CompilerParams(
            dimension_semantics=("parallel", "arbitrary")),
    )(p2, t2)

    # Tiny final reduce (8 x 128 x n_chunks) + divide by the TRUE batch size.
    return jnp.sum(partials) / n


def msle_loss(pred, target, *, use_pallas=None, tile_rows=None, num_chunks=None):
    assert pred.shape == target.shape
    assert pred.ndim == 2 and pred.shape[1] >= 3
    n, c = pred.shape
    total = n * c
    # In-kernel column mask assumes C | 128 (power of two) and 32-bit flat indices;
    # otherwise the fused XLA path is used (still exact).
    # TODO(synk): general-C column select needs a vector remainder by non-pow2.
    pallas_ok = (_LANES % c == 0) and (total < 2 ** 31)
    if use_pallas is None:
        # The kernel only wins in the HBM-bound regime (~1M+ elements).
        use_pallas = total >= (1 << 20)
    if not (use_pallas and pallas_ok):
        return _msle_jax(pred, target)
    return _msle_pallas(pred, target, tile_rows=tile_rows, num_chunks=num_chunks)


if __name__ == "__main__":
    key = jax.random.PRNGKey(0)
    k1, k2, k3, k4, k5, k6 = jax.random.split(key, 6)

    # Test 1: module-natural small shape (batch=8, channels=4); force the Pallas
    # path (ragged pad fallback, single (1,128) tile, tiny-tile reduce branch).
    N, C = 8, 4
    pred = jax.random.uniform(k1, (N, C), jnp.float32, 0.0, 2.0)
    target = jax.random.uniform(k2, (N, C), jnp.float32, 0.0, 2.0)
    out = jax.block_until_ready(msle_loss(pred, target, use_pallas=True))
    ref = _msle_jax(pred, target)
    assert jnp.allclose(out, ref, rtol=1e-5, atol=1e-6), (out, ref)

    # Test 2: multi-tile + 2-chunk ("parallel") grid, partial last block, phantom
    # block clamping, and the ragged (N*C % 128 != 0) path, with a tiny tile.
    N2 = 2100
    pred2 = jax.random.uniform(k3, (N2, C), jnp.float32, 0.0, 2.0)
    target2 = jax.random.uniform(k4, (N2, C), jnp.float32, 0.0, 2.0)
    out2 = jax.block_until_ready(
        msle_loss(pred2, target2, use_pallas=True, tile_rows=8, num_chunks=2))
    ref2 = _msle_jax(pred2, target2)
    assert jnp.allclose(out2, ref2, rtol=1e-5, atol=1e-6), (out2, ref2)

    # Test 3: bf16 inputs stay bf16 across the HBM wire; cast to f32 in-kernel.
    N3 = 512
    pred3 = jax.random.uniform(k5, (N3, C), jnp.float32, 0.0, 2.0).astype(jnp.bfloat16)
    target3 = jax.random.uniform(k6, (N3, C), jnp.float32, 0.0, 2.0).astype(jnp.bfloat16)
    out3 = jax.block_until_ready(msle_loss(pred3, target3, use_pallas=True))
    ref3 = _msle_jax(pred3.astype(jnp.float32), target3.astype(jnp.float32))
    assert jnp.allclose(out3, ref3, rtol=1e-5, atol=1e-6), (out3, ref3)

    print("KERNEL_OK")
</pallas_src>

<mosaic_0001>
module attributes {stable_mosaic.version = 11 : i64} {
  func.func @kernel(%arg0: i32, %arg1: i32, %arg2: memref<1x128xf32, #tpu.memory_space<vmem>>, %arg3: memref<1x128xf32, #tpu.memory_space<vmem>>, %arg4: memref<8x128xf32, #tpu.memory_space<vmem>>) attributes {dimension_semantics = [#tpu.dimension_semantics<parallel>, #tpu.dimension_semantics<arbitrary>], iteration_bounds = array<i64: 1, 1>, scalar_prefetch = 0 : i64, scratch_operands = 0 : i64, tpu.core_type = #tpu.core_type<tc>, window_params = [{transform_indices = @transform_0, window_bounds = array<i64: 1, 128>}, {transform_indices = @transform_1, window_bounds = array<i64: 1, 128>}, {transform_indices = @transform_2, window_bounds = array<i64: 8, 128>}]} {
    %c0_i32 = arith.constant 0 : i32
    %0 = arith.cmpi eq, %arg1, %c0_i32 : i32
    %1 = arith.extui %0 : i1 to i32
    %c0_i32_0 = arith.constant 0 : i32
    %2 = arith.cmpi ne, %1, %c0_i32_0 : i32
    scf.if %2 {
      %cst_13 = arith.constant 0.000000e+00 : f32
      %40 = vector.broadcast %cst_13 : f32 to vector<8x128xf32>
      %c0_14 = arith.constant 0 : index
      %c0_15 = arith.constant 0 : index
      %41 = vector.load %arg4[%c0_14, %c0_15] : memref<8x128xf32, #tpu.memory_space<vmem>>, vector<8x128xf32>
      tpu.vector_store %arg4[%c0_14, %c0_15], %40 {strides = array<i32>} : memref<8x128xf32, #tpu.memory_space<vmem>>, vector<8x128xf32>,
    } else {
    }
    %c0 = arith.constant 0 : index
    %c0_1 = arith.constant 0 : index
    %3 = vector.load %arg2[%c0, %c0_1] : memref<1x128xf32, #tpu.memory_space<vmem>>, vector<1x128xf32>
    %c0_2 = arith.constant 0 : index
    %c0_3 = arith.constant 0 : index
    %4 = vector.load %arg3[%c0_2, %c0_3] : memref<1x128xf32, #tpu.memory_space<vmem>>, vector<1x128xf32>
    %5 = math.log1p %3 : vector<1x128xf32>
    %6 = math.log1p %4 : vector<1x128xf32>
    %7 = arith.subf %5, %6 : vector<1x128xf32>
    %8 = arith.mulf %7, %7 : vector<1x128xf32>
    %c1_i32 = arith.constant 1 : i32
    %9 = arith.muli %arg0, %c1_i32 : i32
    %10 = arith.addi %9, %arg1 : i32
    %11 = tpu.iota {dimensions = array<i32: 0>} : vector<1x128xi32>
    %12 = tpu.iota {dimensions = array<i32: 1>} : vector<1x128xi32>
    %c1_i32_4 = arith.constant 1 : i32
    %13 = arith.muli %10, %c1_i32_4 : i32
    %14 = vector.broadcast %13 : i32 to vector<1x128xi32>
    %15 = arith.addi %14, %11 : vector<1x128xi32>
    %c128_i32 = arith.constant 128 : i32
    %16 = vector.broadcast %c128_i32 : i32 to vector<1x128xi32>
    %17 = arith.muli %15, %16 : vector<1x128xi32>
    %18 = arith.addi %17, %12 : vector<1x128xi32>
    %c3_i32 = arith.constant 3 : i32
    %19 = vector.broadcast %c3_i32 : i32 to vector<1x128xi32>
    %20 = arith.andi %12, %19 : vector<1x128xi32>
    %c1_i32_5 = arith.constant 1 : i32
    %21 = vector.broadcast %c1_i32_5 : i32 to vector<1x128xi32>
    %22 = arith.cmpi eq, %20, %21 : vector<1x128xi32>
    %c32_i32 = arith.constant 32 : i32
    %23 = vector.broadcast %c32_i32 : i32 to vector<1x128xi32>
    %24 = arith.cmpi slt, %18, %23 : vector<1x128xi32>
    %25 = arith.andi %22, %24 : vector<1x128xi1>
    %cst = arith.constant 0.000000e+00 : f32
    %26 = vector.broadcast %cst : f32 to vector<1x128xf32>
    %27 = arith.select %25, %8, %26 : vector<1x128xi1>, vector<1x128xf32>
    %28 = tpu.iota {dimensions = array<i32: 0>} : vector<8x128xi32>
    %c0_i32_6 = arith.constant 0 : i32
    %29 = vector.broadcast %c0_i32_6 : i32 to vector<8x128xi32>
    %30 = arith.cmpi eq, %28, %29 : vector<8x128xi32>
    %cst_7 = arith.constant dense<0.000000e+00> : vector<128xf32>
    %31 = vector.multi_reduction <add>, %27, %cst_7 [0] : vector<1x128xf32> to vector<128xf32>
    %32 = vector.shape_cast %31 : vector<128xf32> to vector<1x128xf32>
    %cst_8 = arith.constant 0.000000e+00 : f32
    %33 = vector.shape_cast %32 : vector<1x128xf32> to vector<1x128xf32>
    %34 = vector.broadcast %33 : vector<1x128xf32> to vector<8x128xf32>
    %35 = vector.broadcast %cst_8 : f32 to vector<8x128xf32>
    %36 = arith.select %30, %34, %35 : vector<8x128xi1>, vector<8x128xf32>
    %c0_9 = arith.constant 0 : index
    %c0_10 = arith.constant 0 : index
    %37 = vector.load %arg4[%c0_9, %c0_10] : memref<8x128xf32, #tpu.memory_space<vmem>>, vector<8x128xf32>
    %38 = arith.addf %37, %36 : vector<8x128xf32>
    %c0_11 = arith.constant 0 : index
    %c0_12 = arith.constant 0 : index
    %39 = vector.load %arg4[%c0_11, %c0_12] : memref<8x128xf32, #tpu.memory_space<vmem>>, vector<8x128xf32>
    tpu.vector_store %arg4[%c0_11, %c0_12], %38 {strides = array<i32>} : memref<8x128xf32, #tpu.memory_space<vmem>>, vector<8x128xf32>,
    return
  }
  func.func @transform_0(%arg0: i32, %arg1: i32) -> (i32, i32) {
    %c1_i32 = arith.constant 1 : i32
    %0 = arith.muli %arg0, %c1_i32 : i32
    %1 = arith.addi %0, %arg1 : i32
    %c0_i32 = arith.constant 0 : i32
    %2 = arith.minsi %1, %c0_i32 : i32
    %c0_i32_0 = arith.constant 0 : i32
    %c0_i32_1 = arith.constant 0 : i32
    return %2, %c0_i32_0 : i32, i32
  }
  func.func @transform_1(%arg0: i32, %arg1: i32) -> (i32, i32) {
    %c1_i32 = arith.constant 1 : i32
    %0 = arith.muli %arg0, %c1_i32 : i32
    %1 = arith.addi %0, %arg1 : i32
    %c0_i32 = arith.constant 0 : i32
    %2 = arith.minsi %1, %c0_i32 : i32
    %c0_i32_0 = arith.constant 0 : i32
    %c0_i32_1 = arith.constant 0 : i32
    return %2, %c0_i32_0 : i32, i32
  }
  func.func @transform_2(%arg0: i32, %arg1: i32) -> (i32, i32) {
    %c0_i32 = arith.constant 0 : i32
    %c0_i32_0 = arith.constant 0 : i32
    return %c0_i32, %arg0 : i32, i32
  }
}

</mosaic_0001>

<llo_original>
// kernel: tpu_custom_call.1
$region0: #{tpu_custom_call.1}
  #allocation0 [shape = 'u32[]', space=smem, size = 0x4, offset = 0x4, fixed_abs, tag = 'smem constant byte address 0x4 - core index']
  #allocation1 [shape = 'u32[144,128]{1,0:T(1,128)}', space=vmem, size = 0x12000, scoped, tag = 'internal scratch']
  %s0 = inlined_call_operand.hbm [shape: f32[1,128], index: 0, kind: input, shape index: {}]
  %s1 = inlined_call_operand.vmem [shape: f32[1,128], index: 1, kind: input, shape index: {}]
  %s2 = inlined_call_operand.hbm [shape: f32[8,128], index: 2, kind: output, shape index: {}]
  %s3 = sld [smem:[#allocation0]]
  $region26: #{tpu_custom_call.1} parent=0
    _
  %s5 = ssub.s32 1, %s3
  %s6 = scalar_select 0, %s5, %s3
  $region1: #{tpu_custom_call.1} parent=0
    #allocation2 [shape = 'u8[512]{0}', space=vmem, size = 0x400, scoped, tag = 'input window, operand 0, single buffered']
    #allocation3 [shape = 's32[1]{0}', space=sflag, size = 0x4, scoped, tag = 'scoped memory for tpu_custom_call.1']
    #allocation4 [shape = 's32[1]{0}', space=sflag, size = 0x4, scoped, tag = 'scoped memory for tpu_custom_call.1']
    #allocation5 [shape = 'u8[4096]{0}', space=vmem, size = 0x1000, scoped, tag = 'output window, operand 0, single buffered']
    %7 = vsyncpa [#allocation3], 0
    %8 = vsyncpa [#allocation4], 0
    // Predicated region
    $region2: #{tpu_custom_call.1} parent=1 // pred_check
      _
    $region3: #{tpu_custom_call.1} parent=1 // pred_check_branch
      %10 = sbr.rel (0) target = $region5
    $region4: #{tpu_custom_call.1} parent=1 // pred_region
      %s11 = sadd.s32 0, 0
      %p12 = scmp.lt.s32.totalorder %s11, 0
      %s13 = scalar_select %p12, %s11, 0
      %s15 = ssub.s32 16, 16
      %16 = vsyncadd [#allocation3], %s15
      %s17 = smul.addr %s13, 16
      %s18 = scalar_lea.hbm %s0, %s17
      %s20 = sshll.u32 [#allocation2], 4
      %s21 = int_to_ptr.vmem [resolvable:$true] %s20
      %23 = dma.hbm_to_vmem [thread:$0]  %s18, 16, %s21, [#allocation3]
    $region5: #{tpu_custom_call.1} parent=1 // pred_fallthru
      _
    // Predicated region
    $region6: #{tpu_custom_call.1} parent=1 // pred_check
      _
    $region7: #{tpu_custom_call.1} parent=1 // pred_check_branch
      %25 = sbr.rel (0) target = $region9
    $region8: #{tpu_custom_call.1} parent=1 // pred_region
      %s26 = sadd.s32 0, 0
      %p27 = scmp.lt.s32.totalorder %s26, 0
      %s28 = scalar_select %p27, %s26, 0
      %p29 = scmp.lt.s32.totalorder %s28, 0
      %s30 = scalar_select %p29, %s28, 0
      %s31 = scalar_lea.vmem %s1, %s30
      %s32 = sadd.s32 0, 0
      %p33 = scmp.lt.s32.totalorder %s32, 0
      %s34 = scalar_select %p33, %s32, 0
    $region9: #{tpu_custom_call.1} parent=1 // pred_fallthru
      _
    // Predicated region
    $region10: #{tpu_custom_call.1} parent=1 // pred_check
      _
    $region11: #{tpu_custom_call.1} parent=1 // pred_check_branch
      %36 = sbr.rel (0) target = $region13
    $region12: #{tpu_custom_call.1} parent=1 // pred_region
      %37 = dma.done [#allocation3], 16
    $region13: #{tpu_custom_call.1} parent=1 // pred_fallthru
      _
    %s38 = sadd.s32 0, 0
    %p39 = scmp.lt.s32.totalorder %s38, 0
    %s40 = scalar_select %p39, %s38, 0
    %p41 = scmp.lt.s32.totalorder %s40, 0
    %s42 = scalar_select %p41, %s40, 0
    %s43 = scalar_lea.vmem %s1, %s42
    %s44 = sadd.s32 0, 0
    %p45 = scmp.lt.s32.totalorder %s44, 0
    %s46 = scalar_select %p45, %s44, 0
    %s47 = sadd.s32 0, 0
    %p48 = scmp.lt.s32.totalorder %s47, 0
    %s49 = scalar_select %p48, %s47, 0
    %p50 = scmp.lt.s32.totalorder %s49, 0
    %s51 = scalar_select %p50, %s49, 0
    %s52 = scalar_lea.vmem %s1, %s51
    %s53 = sadd.s32 0, 0
    %p54 = scmp.lt.s32.totalorder %s53, 0
    %s55 = scalar_select %p54, %s53, 0
    %p56 = scmp.eq.s32.totalorder 0, 0
    // Predicated region
    $region14: #{tpu_custom_call.1} parent=1 // pred_check
      %p57 = pneg %p56
    $region15: #{tpu_custom_call.1} parent=1 // pred_check_branch
      %59 = sbr.rel (%p57) target = $region17
    $region16: #{tpu_custom_call.1} parent=1 // pred_region
      %60 = vst [vmem:[#allocation5] sm:$0xff] 0.0
    $region17: #{tpu_custom_call.1} parent=1 // pred_fallthru
      _
    %v61 = vld [vmem:[#allocation2] sm:$0x1]
    %v62 = vld [vmem:[%s52] sm:$0x1]
    %v63 = vadd.f32 %v61, 1.0
    %v64 = vlog2.pop %v63
    %v65 = vmul.f32 %v64, 0.6931472
    %v66 = vmul.f32 -0.5, %v61
    %v67 = vadd.f32 %v66, 1.0
    %v68 = vmul.f32 %v67, %v61
    %v69 = vand.u32 2147483647, %v61
    %vm70 = vcmp.lt.f32.partialorder %v69, 0.0004427343
    %v71 = vsel %vm70, %v68, %v65
    %v72 = vadd.f32 %v62, 1.0
    %v73 = vlog2.pop %v72
    %v74 = vmul.f32 %v73, 0.6931472
    %v75 = vmul.f32 -0.5, %v62
    %v76 = vadd.f32 %v75, 1.0
    %v77 = vmul.f32 %v76, %v62
    %v78 = vand.u32 2147483647, %v62
    %vm79 = vcmp.lt.f32.partialorder %v78, 0.0004427343
    %v80 = vsel %vm79, %v77, %v74
    %v81 = vsub.f32 %v71, %v80
    %v82 = vmul.f32 %v81, %v81
    %s83 = sadd.s32 0, 0
    %v84 = vlaneseq
    %v85 = vshrl.u32 %v84, 7
    %v86 = vlaneseq
    %v87 = vand.u32 %v86, 127
    %v88 = vstv %s83
    %v89 = vadd.s32 %v88, %v85
    %v90 = vmul.u32 %v89, 128
    %v91 = vadd.s32 %v90, %v87
    %v92 = vand.u32 %v87, 3
    %vm93 = vcmp.eq.s32.totalorder %v92, 1
    %vm94 = vcmp.lt.s32.totalorder %v91, 32
    %vm95 = vmand %vm93, %vm94
    %v96 = vsel %vm95, %v82, 0.0
    %vm97 = vcmp.eq.s32.totalorder %v85, 0
    %v98 = vadd.f32 %v96, 0.0
    %v99 = vlaneseq
    %v100 = vshrl.u32 %v99, 7
    %v101 = vsub.s32 0, %v100
    %v102 = vrot.slane %v98, %v101
    %v103 = vsel %vm97, %v102, 0.0
    %v104 = vld [vmem:[#allocation5] sm:$0xff]
    %v105 = vadd.f32 %v104, %v103
    %106 = vst [vmem:[#allocation5] sm:$0xff] %v105
    // Predicated region
    $region18: #{tpu_custom_call.1} parent=1 // pred_check
      _
    $region19: #{tpu_custom_call.1} parent=1 // pred_check_branch
      %108 = sbr.rel (0) target = $region21
    $region20: #{tpu_custom_call.1} parent=1 // pred_region
      %s110 = ssub.s32 128, 128
      %111 = vsyncadd [#allocation4], %s110
      %s113 = sshll.u32 [#allocation5], 4
      %s114 = int_to_ptr.vmem [resolvable:$true] %s113
      %116 = dma.vmem_to_hbm [thread:$0]  %s114, 128, %s2, [#allocation4]
    $region21: #{tpu_custom_call.1} parent=1 // pred_fallthru
      _
    // Predicated region
    $region22: #{tpu_custom_call.1} parent=1 // pred_check
      _
    $region23: #{tpu_custom_call.1} parent=1 // pred_check_branch
      %118 = sbr.rel (0) target = $region25
    $region24: #{tpu_custom_call.1} parent=1 // pred_region
      %119 = dma.done [#allocation4], 128
    $region25: #{tpu_custom_call.1} parent=1 // pred_fallthru
      _
    %120 = vsyncpa [#allocation3], 1
    %121 = vsyncpa [#allocation4], 1

</llo_original>
